<compile_context>
chip_gen: v5e
topology: v5e:2x2
jax: 0.10.0
libtpu: 0.0.40
codegen_flags: <defaults>
</compile_context>

<pallas_src>
import functools

import jax
import jax.numpy as jnp
from jax.experimental import pallas as pl
from jax.experimental.pallas import tpu as pltpu


def _round_up(a: int, m: int) -> int:
    return ((a + m - 1) // m) * m


def _clamp_kernel(x_ref, o_ref, *, min_val, max_val):
    v = x_ref[...]
    # Static Python bounds, cast to the input dtype so integer inputs are not
    # promoted by the clip.
    if min_val is not None:
        v = jnp.maximum(v, jnp.asarray(min_val, dtype=v.dtype))
    if max_val is not None:
        v = jnp.minimum(v, jnp.asarray(max_val, dtype=v.dtype))
    o_ref[...] = v


def _block_budget():
    """Return (block_bytes, vmem_limit_bytes) chosen per TPU generation."""
    vmem = None
    try:
        info = pltpu.get_tpu_info()
        vmem = getattr(info, "vmem_capacity_bytes", None)
    except Exception:
        vmem = None
    if vmem is not None and vmem <= 64 * 1024 * 1024:
        # v7x-class: only 64 MiB VMEM per TC but ~3.2 TB/s HBM -> large blocks
        # to amortize the ~0.35 us per-grid-step overhead; raise the scoped
        # VMEM limit (default 32 MiB) so 4 x 8 MiB buffers fit comfortably.
        return 8 * 1024 * 1024, 48 * 1024 * 1024
    # v5e / v6e (128 MiB VMEM): 3 MiB blocks -> 12 MiB double-buffered
    # footprint, inside v5e's 16 MiB default scoped VMEM, near the measured
    # roofline knee on v6e.
    return 3 * 1024 * 1024, None


def clamp_pallas(x: jax.Array, min_val=-1.0, max_val=1.0) -> jax.Array:
    """Elementwise clamp of x to [min_val, max_val] (torch.clamp semantics)."""
    orig_shape = x.shape
    n = x.size
    if n == 0:
        return x

    LANES = 128
    itemsize = jnp.dtype(x.dtype).itemsize
    sub_mult = 8 * max(1, 4 // itemsize)          # 8 (32-bit) / 16 (16-bit) / 32 (8-bit)

    # ---- lane-dense 2D view (free reshape of contiguous data) ----------------
    if n % LANES == 0:
        cols = next(c for c in (1024, 512, 256, 128) if n % c == 0)
    else:
        # Collapse trailing dims until the row width reaches >= 128 lanes so
        # the lane padding of a block stays < 2x; tiny inputs end up as (1, n).
        cols = 1
        for d in reversed(orig_shape):
            cols *= int(d)
            if cols >= LANES:
                break
    rows = n // cols
    x2d = x.reshape(rows, cols)

    block_bytes, vmem_limit = _block_budget()

    # ---- column tiling (only if one full-width sublane group is too big) -----
    cols_padded = _round_up(cols, LANES)
    if cols_padded * sub_mult * itemsize > block_bytes:
        tc = max(LANES, (block_bytes // (sub_mult * itemsize)) // LANES * LANES)
        tc = min(tc, cols_padded)                  # multiple of 128: legal
    else:
        tc = cols                                  # full width: always legal
    tc_padded = _round_up(tc, LANES)

    # ---- row tiling, budgeted against the padded block width -----------------
    if rows <= sub_mult:
        tm = rows                                  # full dim: always legal
    else:
        tm = max(sub_mult,
                 (block_bytes // (tc_padded * itemsize)) // sub_mult * sub_mult)
        # Megacore (v7x): keep >= 4 row blocks on arrays past ~2 MiB so the
        # parallel grid can shard across both TensorCores.
        if n * itemsize > 2 * 1024 * 1024:
            tm = min(tm, max(sub_mult, _round_up(pl.cdiv(rows, 4), sub_mult)))
        if tm >= rows:
            tm = rows

    grid = (pl.cdiv(rows, tm), pl.cdiv(cols, tc))
    kernel = functools.partial(_clamp_kernel, min_val=min_val, max_val=max_val)

    out2d = pl.pallas_call(
        kernel,
        out_shape=jax.ShapeDtypeStruct((rows, cols), x.dtype),
        grid=grid,
        in_specs=[pl.BlockSpec((tm, tc), lambda i, j: (i, j))],
        out_specs=pl.BlockSpec((tm, tc), lambda i, j: (i, j)),
        compiler_params=pltpu.CompilerParams(
            dimension_semantics=("parallel", "parallel"),   # megacore on v7x
            vmem_limit_bytes=vmem_limit,
        ),
        cost_estimate=pl.CostEstimate(
            flops=2 * n, transcendentals=0, bytes_accessed=2 * n * itemsize),
    )(x2d)

    return out2d.reshape(orig_shape)


class Clamp:
    """Mirrors mon.nn.Clamp: clamps the input to [min, max]."""

    def __init__(self, min: float = -1.0, max: float = 1.0):
        self.min = min
        self.max = max

    def __call__(self, x: jax.Array) -> jax.Array:
        return clamp_pallas(x, self.min, self.max)


if __name__ == "__main__":
    key = jax.random.PRNGKey(0)

    # NCHW input consistent with the module (elementwise -> any shape works).
    x = jax.random.normal(key, (2, 4, 16, 16), dtype=jnp.float32) * 3.0
    module = Clamp(min=-1.0, max=1.0)
    y = jax.block_until_ready(module(x))
    y_ref = jnp.clip(x, -1.0, 1.0)
    assert y.shape == x.shape and y.dtype == x.dtype
    assert jnp.allclose(y, y_ref), "mismatch vs reference clamp (aligned path)"

    # Misaligned element count: exercises the trailing-dim-collapse path.
    x2 = jax.random.normal(jax.random.PRNGKey(1), (3, 5, 7), dtype=jnp.float32) * 3.0
    y2 = jax.block_until_ready(clamp_pallas(x2))
    assert jnp.allclose(y2, jnp.clip(x2, -1.0, 1.0)), "mismatch (misaligned path)"

    # Larger input: multi-block tiled / parallel path.
    x3 = jax.random.normal(jax.random.PRNGKey(2), (4, 8, 128, 256), dtype=jnp.float32) * 3.0
    y3 = jax.block_until_ready(clamp_pallas(x3))
    assert jnp.allclose(y3, jnp.clip(x3, -1.0, 1.0)), "mismatch (tiled path)"

    # Integer dtype: bounds are cast in-kernel, no promotion.
    x4 = jax.random.randint(jax.random.PRNGKey(3), (2, 4, 16, 16), -5, 6, dtype=jnp.int32)
    y4 = jax.block_until_ready(clamp_pallas(x4))
    assert y4.dtype == jnp.int32
    assert jnp.array_equal(y4, jnp.clip(x4, -1, 1)), "mismatch (int path)"

    print("KERNEL_OK")
</pallas_src>

<mosaic_0001>
module attributes {stable_mosaic.version = 11 : i64} {
  func.func @_clamp_kernel(%arg0: i32, %arg1: i32, %arg2: memref<2x1024xf32, #tpu.memory_space<vmem>>, %arg3: memref<2x1024xf32, #tpu.memory_space<vmem>>) attributes {dimension_semantics = [#tpu.dimension_semantics<parallel>, #tpu.dimension_semantics<parallel>], iteration_bounds = array<i64: 1, 1>, scalar_prefetch = 0 : i64, scratch_operands = 0 : i64, tpu.core_type = #tpu.core_type<tc>, window_params = [{transform_indices = @transform_0, window_bounds = array<i64: 2, 1024>}, {transform_indices = @transform_1, window_bounds = array<i64: 2, 1024>}]} {
    %c0 = arith.constant 0 : index
    %c0_0 = arith.constant 0 : index
    %0 = vector.load %arg2[%c0, %c0_0] : memref<2x1024xf32, #tpu.memory_space<vmem>>, vector<2x1024xf32>
    %cst = arith.constant -1.000000e+00 : f32
    %1 = vector.broadcast %cst : f32 to vector<2x1024xf32>
    %2 = arith.maximumf %0, %1 : vector<2x1024xf32>
    %cst_1 = arith.constant 1.000000e+00 : f32
    %3 = vector.broadcast %cst_1 : f32 to vector<2x1024xf32>
    %4 = arith.minimumf %2, %3 : vector<2x1024xf32>
    %c0_2 = arith.constant 0 : index
    %c0_3 = arith.constant 0 : index
    %5 = vector.load %arg3[%c0_2, %c0_3] : memref<2x1024xf32, #tpu.memory_space<vmem>>, vector<2x1024xf32>
    tpu.vector_store %arg3[%c0_2, %c0_3], %4 {strides = array<i32>} : memref<2x1024xf32, #tpu.memory_space<vmem>>, vector<2x1024xf32>,
    return
  }
  func.func @transform_0(%arg0: i32, %arg1: i32) -> (i32, i32) {
    %c0_i32 = arith.constant 0 : i32
    return %arg0, %arg1 : i32, i32
  }
  func.func @transform_1(%arg0: i32, %arg1: i32) -> (i32, i32) {
    %c0_i32 = arith.constant 0 : i32
    return %arg0, %arg1 : i32, i32
  }
}

</mosaic_0001>

<llo_original>
// kernel: tpu_custom_call.1
$region0: #{tpu_custom_call.1}
  #allocation0 [shape = 'u32[]', space=smem, size = 0x4, offset = 0x4, fixed_abs, tag = 'smem constant byte address 0x4 - core index']
  #allocation1 [shape = 'u32[72,128]{1,0:T(1,128)}', space=vmem, size = 0x9000, scoped, tag = 'internal scratch']
  %s0 = inlined_call_operand.hbm [shape: f32[2,1024], index: 0, kind: input, shape index: {}]
  %s1 = inlined_call_operand.hbm [shape: f32[2,1024], index: 1, kind: output, shape index: {}]
  %s2 = sld [smem:[#allocation0]]
  $region18: #{tpu_custom_call.1} parent=0
    _
  %s4 = ssub.s32 1, %s2
  %s5 = scalar_select 0, %s4, %s2
  $region1: #{tpu_custom_call.1} parent=0
    #allocation2 [shape = 'u8[8192]{0}', space=vmem, size = 0x2000, scoped, tag = 'input window, operand 0, single buffered']
    #allocation3 [shape = 's32[1]{0}', space=sflag, size = 0x4, scoped, tag = 'scoped memory for tpu_custom_call.1']
    #allocation4 [shape = 's32[1]{0}', space=sflag, size = 0x4, scoped, tag = 'scoped memory for tpu_custom_call.1']
    #allocation5 [shape = 'u8[8192]{0}', space=vmem, size = 0x2000, scoped, tag = 'output window, operand 0, single buffered']
    %6 = vsyncpa [#allocation3], 0
    %7 = vsyncpa [#allocation4], 0
    // Predicated region
    $region2: #{tpu_custom_call.1} parent=1 // pred_check
      _
    $region3: #{tpu_custom_call.1} parent=1 // pred_check_branch
      %9 = sbr.rel (0) target = $region5
    $region4: #{tpu_custom_call.1} parent=1 // pred_region
      %11 = vsyncadd [#allocation3], 0
      %s13 = sshll.u32 %s0, 4
      %s14 = int_to_ptr.hbm [resolvable:$true] %s13
      %s15 = sshll.u32 [#allocation2], 4
      %s16 = int_to_ptr.vmem [resolvable:$true] %s15
      %18 = dma.hbm_to_vmem [thread:$0]  %s14, 256, %s16, [#allocation3]
    $region5: #{tpu_custom_call.1} parent=1 // pred_fallthru
      _
    // Predicated region
    $region6: #{tpu_custom_call.1} parent=1 // pred_check
      _
    $region7: #{tpu_custom_call.1} parent=1 // pred_check_branch
      %20 = sbr.rel (0) target = $region9
    $region8: #{tpu_custom_call.1} parent=1 // pred_region
      %22 = dma.done [#allocation3], 256
    $region9: #{tpu_custom_call.1} parent=1 // pred_fallthru
      _
    %v23 = vld [vmem:[#allocation2] sm:$0xff]
    %v24 = vld [vmem:[#allocation2 + $0x8] sm:$0xff]
    %v25 = vmax.f32 %v23, -1.0
    %v26 = vmax.f32 %v24, -1.0
    %v27 = vmin.f32 %v25, 1.0
    %v28 = vmin.f32 %v26, 1.0
    %29 = vst [vmem:[#allocation5] sm:$0xff] %v27
    %30 = vst [vmem:[#allocation5 + $0x8] sm:$0xff] %v28
    // Predicated region
    $region10: #{tpu_custom_call.1} parent=1 // pred_check
      _
    $region11: #{tpu_custom_call.1} parent=1 // pred_check_branch
      %32 = sbr.rel (0) target = $region13
    $region12: #{tpu_custom_call.1} parent=1 // pred_region
      %34 = vsyncadd [#allocation4], 0
      %s36 = sshll.u32 [#allocation5], 4
      %s37 = int_to_ptr.vmem [resolvable:$true] %s36
      %s38 = sshll.u32 %s1, 4
      %s39 = int_to_ptr.hbm [resolvable:$true] %s38
      %41 = dma.vmem_to_hbm [thread:$0]  %s37, 256, %s39, [#allocation4]
    $region13: #{tpu_custom_call.1} parent=1 // pred_fallthru
      _
    // Predicated region
    $region14: #{tpu_custom_call.1} parent=1 // pred_check
      _
    $region15: #{tpu_custom_call.1} parent=1 // pred_check_branch
      %43 = sbr.rel (0) target = $region17
    $region16: #{tpu_custom_call.1} parent=1 // pred_region
      %45 = dma.done [#allocation4], 256
    $region17: #{tpu_custom_call.1} parent=1 // pred_fallthru
      _
    %46 = vsyncpa [#allocation3], 1
    %47 = vsyncpa [#allocation4], 1

</llo_original>
